<compile_context>
chip_gen: v7x
topology: tpu7x:2x2x1
jax: 0.10.0
libtpu: 0.0.40
codegen_flags: <defaults>
</compile_context>

<pallas_src>
import math

import jax
import jax.numpy as jnp
from jax.experimental import pallas as pl
from jax.experimental.pallas import tpu as pltpu

# ----- module hyperparameters ------------------------------------------------
K_IN = 100        # nn.Linear in_features
N_LABEL = 40      # default n_label
LANE = 128        # pad output columns to a full vreg lane width


# ----- Pallas kernel: (tm, K) @ (K, Np) + bias, single shot -------------------
def _linear_kernel(x_ref, w_ref, b_ref, o_ref):
    o_ref[...] = (
        jnp.dot(x_ref[...], w_ref[...], preferred_element_type=jnp.float32)
        + b_ref[...]
    ).astype(o_ref.dtype)


# ----- one-time parameter preparation (transpose + lane-pad) -------------------
def prepare_params(w, bias):
    """w: (N, K) torch Linear layout, bias: (N,).

    Returns (w_kn_pad, bias_pad) with shapes (K, Np) and (1, Np) where
    Np = next multiple of 128 >= N (zero-padded columns).
    """
    n, k = w.shape
    n_pad = ((n + LANE - 1) // LANE) * LANE
    w_kn_pad = jnp.zeros((k, n_pad), dtype=w.dtype).at[:, :n].set(w.T)
    bias_pad = jnp.zeros((1, n_pad), dtype=bias.dtype).at[0, :n].set(bias)
    return w_kn_pad, bias_pad


def _choose_tile(B, tm_max=4096):
    """Batch tile: single step for small B; big tiles (but >=2 grid steps so
    the 'parallel' axis shards across both v7x TensorCores) for large B."""
    if B <= 256:
        return B                               # full-extent block, 1 step
    half = -(-B // 2)                          # cdiv(B, 2)
    tm = ((half + 7) // 8) * 8                 # multiple of 8 (sublane)
    return min(tm_max, tm)


# ----- wrapper -----------------------------------------------------------------
def linear_classifier_ctrgcn(x, w_kn_pad, bias_pad, n_label=N_LABEL):
    """Forward pass of LinearClassifierCtrgcn.

    x:         (B, 100) float32
    w_kn_pad:  (100, Np) float32  — from prepare_params
    bias_pad:  (1, Np)   float32  — from prepare_params
    returns    (B, n_label) float32
    """
    B, K = x.shape
    assert K == w_kn_pad.shape[0]
    Np = w_kn_pad.shape[1]

    tm = _choose_tile(B)
    grid = (pl.cdiv(B, tm),)

    out = pl.pallas_call(
        _linear_kernel,
        out_shape=jax.ShapeDtypeStruct((B, Np), x.dtype),
        grid_spec=pltpu.PrefetchScalarGridSpec(
            num_scalar_prefetch=0,
            grid=grid,
            in_specs=[
                pl.BlockSpec((tm, K), lambda i: (i, 0)),    # x rows (streamed)
                pl.BlockSpec((K, Np), lambda i: (0, 0)),    # weight (resident)
                pl.BlockSpec((1, Np), lambda i: (0, 0)),    # bias   (resident)
            ],
            out_specs=pl.BlockSpec((tm, Np), lambda i: (i, 0)),
        ),
        compiler_params=pltpu.CompilerParams(
            dimension_semantics=("parallel",),
            vmem_limit_bytes=32 * 1024 * 1024,
        ),
        cost_estimate=pl.CostEstimate(
            flops=2 * B * K * Np,
            transcendentals=0,
            bytes_accessed=(B * K + K * Np + Np + B * Np) * 4,
        ),
    )(x, w_kn_pad, bias_pad)

    return out[:, :n_label]


# ----- deterministic parameter init (matches the module) ---------------------
def init_params(key, n_label=N_LABEL):
    kw, kb = jax.random.split(key)
    # nn.init.normal_(weight, 0, sqrt(2 / n_label))
    w = math.sqrt(2.0 / n_label) * jax.random.normal(
        kw, (n_label, K_IN), dtype=jnp.float32
    )
    # bias keeps nn.Linear default: U(-1/sqrt(fan_in), 1/sqrt(fan_in))
    bound = 1.0 / math.sqrt(K_IN)
    b = jax.random.uniform(
        kb, (n_label,), minval=-bound, maxval=bound, dtype=jnp.float32
    )
    return w, b


if __name__ == "__main__":
    key = jax.random.PRNGKey(0)
    kx, kx2, kp = jax.random.split(key, 3)

    w, b = init_params(kp)                    # torch layout: (N_LABEL, K_IN)
    w_kn_pad, bias_pad = prepare_params(w, b)  # (100, 128), (1, 128)

    # --- small batch (single grid step, full-extent block) ---
    B1 = 8
    x1 = jax.random.normal(kx, (B1, K_IN), dtype=jnp.float32)
    out1 = jax.block_until_ready(linear_classifier_ctrgcn(x1, w_kn_pad, bias_pad))
    ref1 = x1 @ w.T + b
    assert out1.shape == (B1, N_LABEL)
    assert jnp.allclose(out1, ref1, atol=1e-4, rtol=1e-4)

    # --- larger batch (exercises multi-step parallel grid + ragged last tile) ---
    B2 = 300
    x2 = jax.random.normal(kx2, (B2, K_IN), dtype=jnp.float32)
    out2 = jax.block_until_ready(linear_classifier_ctrgcn(x2, w_kn_pad, bias_pad))
    ref2 = x2 @ w.T + b
    assert out2.shape == (B2, N_LABEL)
    assert jnp.allclose(out2, ref2, atol=1e-4, rtol=1e-4)

    print("KERNEL_OK")
</pallas_src>

<mosaic_0001>
module attributes {stable_mosaic.version = 11 : i64} {
  func.func @_linear_kernel(%arg0: i32, %arg1: memref<8x100xf32, #tpu.memory_space<vmem>>, %arg2: memref<100x128xf32, #tpu.memory_space<vmem>>, %arg3: memref<1x128xf32, #tpu.memory_space<vmem>>, %arg4: memref<8x128xf32, #tpu.memory_space<vmem>>) attributes {dimension_semantics = [#tpu.dimension_semantics<parallel>], iteration_bounds = array<i64: 1>, scalar_prefetch = 0 : i64, scratch_operands = 0 : i64, tpu.core_type = #tpu.core_type<tc>, window_params = [{transform_indices = @transform_0, window_bounds = array<i64: 8, 100>}, {pipeline_mode = #tpu.pipeline_mode<synchronous>, transform_indices = @transform_1, window_bounds = array<i64: 100, 128>}, {pipeline_mode = #tpu.pipeline_mode<synchronous>, transform_indices = @transform_2, window_bounds = array<i64: 1, 128>}, {transform_indices = @transform_3, window_bounds = array<i64: 8, 128>}]} {
    %c0 = arith.constant 0 : index
    %c0_0 = arith.constant 0 : index
    %0 = vector.load %arg1[%c0, %c0_0] : memref<8x100xf32, #tpu.memory_space<vmem>>, vector<8x100xf32>
    %c0_1 = arith.constant 0 : index
    %c0_2 = arith.constant 0 : index
    %1 = vector.load %arg2[%c0_1, %c0_2] : memref<100x128xf32, #tpu.memory_space<vmem>>, vector<100x128xf32>
    %cst = arith.constant dense<0.000000e+00> : vector<8x128xf32>
    %2 = tpu.matmul %0, %1, %cst {dimension_numbers = #tpu.dot_dimension_numbers<[1], [0], [0], [1], [0, 0, 1, 1], [], []>} : vector<8x100xf32>, vector<100x128xf32>, vector<8x128xf32> -> vector<8x128xf32>
    %c0_3 = arith.constant 0 : index
    %c0_4 = arith.constant 0 : index
    %3 = vector.load %arg3[%c0_3, %c0_4] : memref<1x128xf32, #tpu.memory_space<vmem>>, vector<1x128xf32>
    %4 = vector.broadcast %3 : vector<1x128xf32> to vector<8x128xf32>
    %5 = arith.addf %2, %4 : vector<8x128xf32>
    %c0_5 = arith.constant 0 : index
    %c0_6 = arith.constant 0 : index
    %6 = vector.load %arg4[%c0_5, %c0_6] : memref<8x128xf32, #tpu.memory_space<vmem>>, vector<8x128xf32>
    tpu.vector_store %arg4[%c0_5, %c0_6], %5 {strides = array<i32>} : memref<8x128xf32, #tpu.memory_space<vmem>>, vector<8x128xf32>,
    return
  }
  func.func @transform_0(%arg0: i32) -> (i32, i32) {
    %c0_i32 = arith.constant 0 : i32
    %c0_i32_0 = arith.constant 0 : i32
    return %arg0, %c0_i32 : i32, i32
  }
  func.func @transform_1(%arg0: i32) -> (i32, i32) {
    %c0_i32 = arith.constant 0 : i32
    %c0_i32_0 = arith.constant 0 : i32
    %c0_i32_1 = arith.constant 0 : i32
    return %c0_i32, %c0_i32_0 : i32, i32
  }
  func.func @transform_2(%arg0: i32) -> (i32, i32) {
    %c0_i32 = arith.constant 0 : i32
    %c0_i32_0 = arith.constant 0 : i32
    %c0_i32_1 = arith.constant 0 : i32
    return %c0_i32, %c0_i32_0 : i32, i32
  }
  func.func @transform_3(%arg0: i32) -> (i32, i32) {
    %c0_i32 = arith.constant 0 : i32
    %c0_i32_0 = arith.constant 0 : i32
    return %arg0, %c0_i32 : i32, i32
  }
}

</mosaic_0001>

<llo_original>
// kernel: tpu_custom_call.1
$region0: #{tpu_custom_call.1}
  #allocation0 [shape = 'u32[]', space=smem, size = 0x4, offset = 0x4, fixed_abs, tag = 'smem constant byte address 0x4 - core index']
  #allocation1 [shape = 'u32[144,128]{1,0:T(1,128)}', space=vmem, size = 0x12000, scoped, tag = 'internal scratch']
  %s0 = inlined_call_operand.hbm [shape: f32[8,100], index: 0, kind: input, shape index: {}]
  %s1 = inlined_call_operand.hbm [shape: f32[100,128], index: 1, kind: input, shape index: {}]
  %s2 = inlined_call_operand.vmem [shape: f32[1,128], index: 2, kind: input, shape index: {}]
  %s3 = inlined_call_operand.hbm [shape: f32[8,128], index: 3, kind: output, shape index: {}]
  %s4 = sld [smem:[#allocation0]]
  $region30: #{tpu_custom_call.1} parent=0
    _
  %s6 = ssub.s32 1, %s4
  %s7 = scalar_select 0, %s6, %s4
  $region1: #{tpu_custom_call.1} parent=0
    #allocation2 [shape = 'u8[4096]{0}', space=vmem, size = 0x1000, scoped, tag = 'input window, operand 0, single buffered']
    #allocation3 [shape = 's32[1]{0}', space=sflag, size = 0x4, scoped, tag = 'scoped memory for tpu_custom_call.1']
    #allocation4 [shape = 's32[1]{0}', space=sflag, size = 0x4, scoped, tag = 'scoped memory for tpu_custom_call.1']
    #allocation5 [shape = 'u8[53248]{0}', space=vmem, size = 0xd000, scoped, tag = 'input window, operand 1, single buffered']
    #allocation6 [shape = 's32[1]{0}', space=sflag, size = 0x4, scoped, tag = 'scoped memory for tpu_custom_call.1']
    #allocation7 [shape = 'u8[4096]{0}', space=vmem, size = 0x1000, scoped, tag = 'output window, operand 0, single buffered']
    %8 = vsyncpa [#allocation3], 0
    %9 = vsyncpa [#allocation6], 0
    %10 = vsyncpa [#allocation4], 0
    // Predicated region
    $region2: #{tpu_custom_call.1} parent=1 // pred_check
      _
    $region3: #{tpu_custom_call.1} parent=1 // pred_check_branch
      %12 = sbr.rel (0) target = $region5
    $region4: #{tpu_custom_call.1} parent=1 // pred_region
      %s14 = ssub.s32 128, 128
      %15 = vsyncadd [#allocation3], %s14
      %s17 = sshll.u32 [#allocation2], 4
      %s18 = int_to_ptr.vmem [resolvable:$true] %s17
      %20 = dma.hbm_to_vmem [thread:$0]  %s0, 128, %s18, [#allocation3]
    $region5: #{tpu_custom_call.1} parent=1 // pred_fallthru
      _
    // Predicated region
    $region6: #{tpu_custom_call.1} parent=1 // pred_check
      _
    $region7: #{tpu_custom_call.1} parent=1 // pred_check_branch
      %22 = sbr.rel (0) target = $region9
    $region8: #{tpu_custom_call.1} parent=1 // pred_region
      %s24 = ssub.s32 1664, 1664
      %25 = vsyncadd [#allocation6], %s24
      %s26 = sshll.u32 [#allocation5], 4
      %s27 = int_to_ptr.vmem [resolvable:$true] %s26
      %32 = dma.hbm_to_vmem [thread:$0]  %s1, 1664, %s27, [#allocation6], 128, 128, 8
    $region9: #{tpu_custom_call.1} parent=1 // pred_fallthru
      _
    // Predicated region
    $region10: #{tpu_custom_call.1} parent=1 // pred_check
      _
    $region11: #{tpu_custom_call.1} parent=1 // pred_check_branch
      %34 = sbr.rel (0) target = $region13
    $region12: #{tpu_custom_call.1} parent=1 // pred_region
      _
    $region13: #{tpu_custom_call.1} parent=1 // pred_fallthru
      _
    // Predicated region
    $region14: #{tpu_custom_call.1} parent=1 // pred_check
      _
    $region15: #{tpu_custom_call.1} parent=1 // pred_check_branch
      %36 = sbr.rel (0) target = $region17
    $region16: #{tpu_custom_call.1} parent=1 // pred_region
      %37 = dma.done [#allocation3], 128
    $region17: #{tpu_custom_call.1} parent=1 // pred_fallthru
      _
    // Predicated region
    $region18: #{tpu_custom_call.1} parent=1 // pred_check
      _
    $region19: #{tpu_custom_call.1} parent=1 // pred_check_branch
      %39 = sbr.rel (0) target = $region21
    $region20: #{tpu_custom_call.1} parent=1 // pred_region
      %40 = dma.done [#allocation6], 1664
    $region21: #{tpu_custom_call.1} parent=1 // pred_fallthru
      _
    %v41 = vld [vmem:[#allocation2] sm:$0xff]
    %v42 = vld [vmem:[#allocation5] sm:$0xff]
    %v43 = vld [vmem:[#allocation5 + $0x8] sm:$0xff]
    %v44 = vld [vmem:[#allocation5 + $0x10] sm:$0xff]
    %v45 = vld [vmem:[#allocation5 + $0x18] sm:$0xff]
    %v46 = vld [vmem:[#allocation5 + $0x20] sm:$0xff]
    %v47 = vld [vmem:[#allocation5 + $0x28] sm:$0xff]
    %v48 = vld [vmem:[#allocation5 + $0x30] sm:$0xff]
    %v49 = vld [vmem:[#allocation5 + $0x38] sm:$0xff]
    %v50 = vld [vmem:[#allocation5 + $0x40] sm:$0xff]
    %v51 = vld [vmem:[#allocation5 + $0x48] sm:$0xff]
    %v52 = vld [vmem:[#allocation5 + $0x50] sm:$0xff]
    %v53 = vld [vmem:[#allocation5 + $0x58] sm:$0xff]
    %v54 = vld [vmem:[#allocation5 + $0x60] sm:$0xf]
    %v55 = vld [vmem:[%s2] sm:$0x1]
    %v57 = vlaneseq
    %v58 = vshrl.u32 %v57, 7
    %v59 = vsub.s32 0, %v58
    %v60 = vrot.slane %v55, %v59
    %vm62 = vcmask 818176
    %v64 = vsel %vm62, %v41, 0
    %vm66 = vcmask 1043456
    %v68 = vsel %vm66, %v54, 0
    %70 = vmatprep.subr.mxu0 0.0
    %71 = vmatpush1.msra.mxu0 %v42
    %72 = vmatprep.subr.mxu0 0.0
    %73 = vmatpush1.msra.mxu0 %v43
    %74 = vmatprep.subr.mxu0 0.0
    %75 = vmatpush1.msra.mxu0 %v44
    %76 = vmatprep.subr.mxu0 0.0
    %77 = vmatpush1.msra.mxu0 %v45
    %78 = vmatprep.subr.mxu0 0.0
    %79 = vmatpush1.msra.mxu0 %v46
    %80 = vmatprep.subr.mxu0 0.0
    %81 = vmatpush1.msra.mxu0 %v47
    %82 = vmatprep.subr.mxu0 0.0
    %83 = vmatpush1.msra.mxu0 %v48
    %84 = vmatprep.subr.mxu0 0.0
    %85 = vmatpush1.msra.mxu0 %v49
    %86 = vmatprep.subr.mxu0 0.0
    %87 = vmatpush1.msra.mxu0 %v50
    %88 = vmatprep.subr.mxu0 0.0
    %89 = vmatpush1.msra.mxu0 %v51
    %90 = vmatprep.subr.mxu0 0.0
    %91 = vmatpush1.msra.mxu0 %v52
    %92 = vmatprep.subr.mxu0 0.0
    %93 = vmatpush1.msra.mxu0 %v53
    %94 = vmatprep.subr.mxu0 0.0
    %95 = vmatpush1.msra.mxu0 %v68
    %96 = vmatprep.subr.mxu0 0.0
    %97 = vmatpush1.msra.mxu0 0.0
    %98 = vmatprep.subr.mxu0 0.0
    %99 = vmatpush1.msra.mxu0 0.0
    %100 = vmatprep.subr.mxu0 0.0
    %101 = vmatpush1.msra.mxu0 0.0
    %102 = vmatprep.subr.mxu0 0.0
    %103 = vmatpush1.msra.mxu0 0.0
    %104 = vmatprep.subr.mxu0 0.0
    %105 = vmatpush1.msra.mxu0 0.0
    %106 = vmatprep.subr.mxu0 0.0
    %107 = vmatpush1.msra.mxu0 0.0
    %108 = vmatprep.subr.mxu0 0.0
    %109 = vmatpush1.msra.mxu0 0.0
    %110 = vmatprep.subr.mxu0 0.0
    %111 = vmatpush1.msra.mxu0 0.0
    %112 = vmatprep.subr.mxu0 0.0
    %113 = vmatpush1.msra.mxu0 0.0
    %114 = vmatprep.subr.mxu0 0.0
    %115 = vmatpush1.msra.mxu0 0.0
    %116 = vmatprep.subr.mxu0 0.0
    %117 = vmatpush1.msra.mxu0 0.0
    %118 = vmatprep.subr.mxu0 0.0
    %119 = vmatpush1.msra.mxu0 0.0
    %120 = vmatprep.subr.mxu0 0.0
    %121 = vmatpush1.msra.mxu0 0.0
    %122 = vmatprep.subr.mxu0 0.0
    %123 = vmatpush1.msra.mxu0 0.0
    %124 = vmatprep.subr.mxu0 0.0
    %125 = vmatpush1.msra.mxu0 0.0
    %126 = vmatprep.subr.mxu0 0.0
    %127 = vmatpush1.msra.mxu0 0.0
    %128 = vmatprep.subr.mxu0 0.0
    %129 = vmatpush1.msra.mxu0 0.0
    %130 = vmatprep.subr.mxu0 0.0
    %131 = vmatpush1.msra.mxu0 0.0
    %132 = vmatprep.subr.mxu0 0.0
    %133 = vmatpush1.msra.mxu0 0.0
    %134 = vmatprep.mubr.f32.mxu0 0.0
    %135 = vmatmul.mubr.f32.gmra.mrb[0].mxu0 %v64
    %v136 = vpop.f32.mrb[0].mxu0
    %v137 = vadd.f32 %v60, %v136
    %v138 = vpop.f32.mrb[0].mxu0
    %139 = vdwg.mxu0
    %140 = vst [vmem:[#allocation7] sm:$0xff] %v137
    // Predicated region
    $region22: #{tpu_custom_call.1} parent=1 // pred_check
      _
    $region23: #{tpu_custom_call.1} parent=1 // pred_check_branch
      %142 = sbr.rel (0) target = $region25
    $region24: #{tpu_custom_call.1} parent=1 // pred_region
      %s144 = ssub.s32 128, 128
      %145 = vsyncadd [#allocation4], %s144
      %s147 = sshll.u32 [#allocation7], 4
      %s148 = int_to_ptr.vmem [resolvable:$true] %s147
      %150 = dma.vmem_to_hbm [thread:$0]  %s148, 128, %s3, [#allocation4]
    $region25: #{tpu_custom_call.1} parent=1 // pred_fallthru
      _
    // Predicated region
    $region26: #{tpu_custom_call.1} parent=1 // pred_check
      _
    $region27: #{tpu_custom_call.1} parent=1 // pred_check_branch
      %152 = sbr.rel (0) target = $region29
    $region28: #{tpu_custom_call.1} parent=1 // pred_region
      %153 = dma.done [#allocation4], 128
    $region29: #{tpu_custom_call.1} parent=1 // pred_fallthru
      _
    %154 = vsyncpa [#allocation3], 1
    %155 = vsyncpa [#allocation6], 1
    %156 = vsyncpa [#allocation4], 1

</llo_original>
